<compile_context>
chip_gen: v7x
topology: tpu7x:2x2x1
jax: 0.10.0
libtpu: 0.0.40
codegen_flags: <defaults>
</compile_context>

<pallas_src>
import jax
import jax.numpy as jnp
from jax.experimental import pallas as pl
from jax.experimental.pallas import tpu as pltpu

EPS = 1e-5  # nn.LayerNorm default


def _f32(x):
    return x if x.dtype == jnp.float32 else x.astype(jnp.float32)


def fusion_kernel(feat_ref, cloth_ref, w_ref, b_ref, gamma_ref, beta_ref, out_ref):
    D = feat_ref.shape[-1]

    cloth_in = cloth_ref[...]
    w = w_ref[...]
    # Feed the MXU in the weight dtype (bf16 weights -> bf16 x bf16 at full rate);
    # accumulate in f32.
    cloth_mm = cloth_in if cloth_in.dtype == w.dtype else cloth_in.astype(w.dtype)

    # One fused FiLM projection: (block_b, D) x (D, 2D) -> (block_b, 2D).
    proj = jnp.dot(cloth_mm, w, preferred_element_type=jnp.float32)
    proj = proj + _f32(b_ref[...])
    scale = proj[:, :D]
    shift = proj[:, D:]

    # Elementwise / LayerNorm math in f32 (cast only if needed).
    feat = _f32(feat_ref[...])
    cloth = _f32(cloth_in)

    # FiLM modulation + residual (dropout == identity in eval mode).
    x = scale * feat + shift + cloth

    # LayerNorm over the feature dimension (biased variance, eps inside rsqrt).
    mean = jnp.mean(x, axis=-1, keepdims=True)
    centered = x - mean
    var = jnp.mean(centered * centered, axis=-1, keepdims=True)
    inv = jax.lax.rsqrt(var + EPS)
    y = centered * inv * _f32(gamma_ref[...]) + _f32(beta_ref[...])

    out_ref[...] = y.astype(out_ref.dtype)


def _chip_info():
    """(vmem_capacity_bytes, num_tensorcores).  v7x: 64 MiB / 2 TCs; v5e/v6e: 128 MiB / 1 TC."""
    vmem_cap = 128 * 1024 * 1024
    num_cores = 1
    try:
        info = pltpu.get_tpu_info()
        vmem_cap = int(getattr(info, "vmem_capacity_bytes", vmem_cap))
        num_cores = 2 if vmem_cap <= 64 * 1024 * 1024 else 1
    except Exception:
        vmem_cap = 64 * 1024 * 1024   # conservative fallback if the query fails
        num_cores = 2
    return vmem_cap, num_cores


def _pick_block_b(B, D, act_itemsize, w_itemsize, *, vmem_cap, num_cores):
    """Largest legal row tile that fits VMEM; chip-aware grid-step preference."""
    if vmem_cap <= (64 << 20):                 # v7x: leave headroom on 64 MiB
        budget = vmem_cap - (16 << 20)
    else:                                      # v5e / v6e: 128 MiB
        budget = min(vmem_cap - (24 << 20), 96 << 20)
    const_bytes = 2 * D * D * w_itemsize + 4 * D * 4   # single-buffered W + b + gamma/beta
    avail = max(budget - const_bytes, 4 << 20)

    sub = 16 if act_itemsize < 4 else 8        # sublane alignment for partial tiles

    def fits(bb):
        act = 3 * 2 * bb * D * act_itemsize    # feat/cloth/out, double-buffered
        tmp = 4 * bb * 2 * D * 4               # in-kernel f32 temporaries
        return act + tmp <= avail

    aligned = [c for c in range(1, B + 1)
               if B % c == 0 and (c == B or c % sub == 0)]
    cands = sorted((c for c in aligned if fits(c)), reverse=True)
    if not cands:
        return min(aligned)                    # smallest legal tile; rely on vmem_limit

    def best(pool):
        # Prefer M tiles that fill whole MXU passes.
        for align in (256, 128, sub):
            a = [c for c in pool if c % align == 0]
            if a:
                return a[0]
        return pool[0]

    if num_cores > 1:
        # v7x: give each TensorCore >=2 pipelined iterations when possible.
        for steps in (2 * num_cores, num_cores):
            multi = [c for c in cands if B // c >= steps]
            if multi:
                return best(multi)
    # Single-TC chips (v5e/v6e): just take the biggest tile toward the HBM roofline.
    return best(cands)


def fuse_fusion_params(w_scale, b_scale, w_shift, b_shift, gamma, beta,
                       *, matmul_dtype=None):
    """Fuse parameters ONCE (hoisted out of the per-call forward path)."""
    D = w_scale.shape[0]
    w_fused = jnp.concatenate([w_scale, w_shift], axis=1)          # (D, 2D)
    if matmul_dtype is not None:
        w_fused = w_fused.astype(matmul_dtype)
    b_fused = jnp.concatenate([b_scale, b_shift]).astype(jnp.float32).reshape(1, 2 * D)
    gamma2 = gamma.astype(jnp.float32).reshape(1, D)
    beta2 = beta.astype(jnp.float32).reshape(1, D)
    return w_fused, b_fused, gamma2, beta2


def fusion_layer_fused(feat, cloth, w_fused, b_fused, gamma2, beta2, *, block_b=None):
    """feat, cloth: (B, D). w_fused: (D, 2D). b_fused: (1, 2D). gamma2/beta2: (1, D)."""
    B, D = feat.shape
    assert cloth.shape == (B, D)
    assert w_fused.shape == (D, 2 * D)

    vmem_cap, num_cores = _chip_info()
    act_itemsize = jnp.dtype(feat.dtype).itemsize
    w_itemsize = jnp.dtype(w_fused.dtype).itemsize

    if block_b is None:
        block_b = _pick_block_b(B, D, act_itemsize, w_itemsize,
                                vmem_cap=vmem_cap, num_cores=num_cores)
    assert B % block_b == 0, "batch must be divisible by block_b"
    grid = (B // block_b,)

    row_spec = pl.BlockSpec((block_b, D), lambda i: (i, 0))
    # Constant operands: constant index_map -> never re-fetched; single-buffer them.
    w_spec = pl.BlockSpec((D, 2 * D), lambda i: (0, 0), pipeline_mode=pl.Buffered(1))
    b_spec = pl.BlockSpec((1, 2 * D), lambda i: (0, 0), pipeline_mode=pl.Buffered(1))
    vec_spec = pl.BlockSpec((1, D), lambda i: (0, 0), pipeline_mode=pl.Buffered(1))

    # Chip-aware scoped-VMEM limit.
    const_bytes = 2 * D * D * w_itemsize + 4 * D * 4
    est = (const_bytes
           + 3 * 2 * block_b * D * act_itemsize     # feat/cloth/out, double-buffered
           + 4 * block_b * 2 * D * 4)               # in-kernel f32 temporaries
    if vmem_cap <= (64 << 20):
        ceiling = vmem_cap - (12 << 20)              # v7x: keep >=12 MiB slack
    else:
        ceiling = min(vmem_cap - (16 << 20), 100 << 20)
    vmem_limit = int(min(max(int(est * 1.5), 32 << 20), ceiling))

    return pl.pallas_call(
        fusion_kernel,
        out_shape=jax.ShapeDtypeStruct((B, D), feat.dtype),
        grid_spec=pltpu.PrefetchScalarGridSpec(
            num_scalar_prefetch=0,
            grid=grid,
            in_specs=[row_spec, row_spec, w_spec, b_spec, vec_spec, vec_spec],
            out_specs=row_spec,
        ),
        compiler_params=pltpu.CompilerParams(
            dimension_semantics=("parallel",),
            vmem_limit_bytes=vmem_limit),
    )(feat, cloth, w_fused, b_fused, gamma2, beta2)


def fusion_layer(feat, cloth, w_scale, b_scale, w_shift, b_shift, gamma, beta,
                 *, block_b=None, matmul_dtype=None):
    """Convenience wrapper that fuses parameters on the fly (prefer fuse_fusion_params
    + fusion_layer_fused in real use so the concat is not re-done every call)."""
    fused = fuse_fusion_params(w_scale, b_scale, w_shift, b_shift, gamma, beta,
                               matmul_dtype=matmul_dtype)
    return fusion_layer_fused(feat, cloth, *fused, block_b=block_b)


def reference(feat, cloth, w_scale, b_scale, w_shift, b_shift, gamma, beta):
    scale = cloth @ w_scale + b_scale
    shift = cloth @ w_shift + b_shift
    x = scale * feat + shift + cloth
    mean = jnp.mean(x, axis=-1, keepdims=True)
    var = jnp.mean((x - mean) ** 2, axis=-1, keepdims=True)
    return (x - mean) * jax.lax.rsqrt(var + EPS) * gamma + beta


if __name__ == "__main__":
    # Small but non-toy shapes: enough rows for a full MXU tile.
    B, D = 256, 128
    key = jax.random.PRNGKey(0)
    k_feat, k_cloth, k_ws, k_bs, k_wsh, k_bsh = jax.random.split(key, 6)

    feat = jax.random.normal(k_feat, (B, D), dtype=jnp.float32)
    cloth = jax.random.normal(k_cloth, (B, D), dtype=jnp.float32)

    # Deterministic parameter init (Linear weights stored as (in, out)).
    bound = 1.0 / (D ** 0.5)
    w_scale = jax.random.uniform(k_ws, (D, D), jnp.float32, -bound, bound)
    b_scale = jax.random.uniform(k_bs, (D,), jnp.float32, -bound, bound)
    w_shift = jax.random.uniform(k_wsh, (D, D), jnp.float32, -bound, bound)
    b_shift = jax.random.uniform(k_bsh, (D,), jnp.float32, -bound, bound)
    gamma = jnp.ones((D,), jnp.float32)   # LayerNorm weight init
    beta = jnp.zeros((D,), jnp.float32)   # LayerNorm bias init

    ref = reference(feat, cloth, w_scale, b_scale, w_shift, b_shift, gamma, beta)

    # f32 path: fuse params once, then call the kernel.
    fused_f32 = fuse_fusion_params(w_scale, b_scale, w_shift, b_shift, gamma, beta)
    out = jax.block_until_ready(fusion_layer_fused(feat, cloth, *fused_f32))
    assert out.shape == (B, D)
    assert jnp.allclose(out, ref, atol=1e-4, rtol=1e-4), "f32 mismatch vs reference"

    # bf16-weight path (full-rate MXU, half the weight DMA/VMEM); LN math stays f32.
    fused_bf16 = fuse_fusion_params(w_scale, b_scale, w_shift, b_shift, gamma, beta,
                                    matmul_dtype=jnp.bfloat16)
    out_bf16 = jax.block_until_ready(fusion_layer_fused(feat, cloth, *fused_bf16))
    assert jnp.allclose(out_bf16, ref, atol=3e-2, rtol=3e-2), "bf16 mismatch vs reference"

    print("KERNEL_OK")
</pallas_src>

<mosaic_0001>
module attributes {stable_mosaic.version = 11 : i64} {
  func.func @fusion_kernel(%arg0: i32, %arg1: memref<64x128xf32, #tpu.memory_space<vmem>>, %arg2: memref<64x128xf32, #tpu.memory_space<vmem>>, %arg3: memref<128x256xf32, #tpu.memory_space<vmem>>, %arg4: memref<1x256xf32, #tpu.memory_space<vmem>>, %arg5: memref<1x128xf32, #tpu.memory_space<vmem>>, %arg6: memref<1x128xf32, #tpu.memory_space<vmem>>, %arg7: memref<64x128xf32, #tpu.memory_space<vmem>>) attributes {dimension_semantics = [#tpu.dimension_semantics<parallel>], iteration_bounds = array<i64: 4>, scalar_prefetch = 0 : i64, scratch_operands = 0 : i64, tpu.core_type = #tpu.core_type<tc>, window_params = [{transform_indices = @transform_0, window_bounds = array<i64: 64, 128>}, {transform_indices = @transform_1, window_bounds = array<i64: 64, 128>}, {pipeline_mode = #tpu.pipeline_mode<synchronous>, transform_indices = @transform_2, window_bounds = array<i64: 128, 256>}, {pipeline_mode = #tpu.pipeline_mode<synchronous>, transform_indices = @transform_3, window_bounds = array<i64: 1, 256>}, {pipeline_mode = #tpu.pipeline_mode<synchronous>, transform_indices = @transform_4, window_bounds = array<i64: 1, 128>}, {pipeline_mode = #tpu.pipeline_mode<synchronous>, transform_indices = @transform_5, window_bounds = array<i64: 1, 128>}, {transform_indices = @transform_6, window_bounds = array<i64: 64, 128>}]} {
    %c0 = arith.constant 0 : index
    %c0_0 = arith.constant 0 : index
    %0 = vector.load %arg2[%c0, %c0_0] : memref<64x128xf32, #tpu.memory_space<vmem>>, vector<64x128xf32>
    %c0_1 = arith.constant 0 : index
    %c0_2 = arith.constant 0 : index
    %1 = vector.load %arg3[%c0_1, %c0_2] : memref<128x256xf32, #tpu.memory_space<vmem>>, vector<128x256xf32>
    %cst = arith.constant dense<0.000000e+00> : vector<64x256xf32>
    %2 = tpu.matmul %0, %1, %cst {dimension_numbers = #tpu.dot_dimension_numbers<[1], [0], [0], [1], [0, 0, 1, 1], [], []>} : vector<64x128xf32>, vector<128x256xf32>, vector<64x256xf32> -> vector<64x256xf32>
    %c0_3 = arith.constant 0 : index
    %c0_4 = arith.constant 0 : index
    %3 = vector.load %arg4[%c0_3, %c0_4] : memref<1x256xf32, #tpu.memory_space<vmem>>, vector<1x256xf32>
    %4 = vector.broadcast %3 : vector<1x256xf32> to vector<64x256xf32>
    %5 = arith.addf %2, %4 : vector<64x256xf32>
    %6 = vector.extract_strided_slice %5 {offsets = [0, 0], sizes = [64, 128], strides = [1, 1]} : vector<64x256xf32> to vector<64x128xf32>
    %7 = vector.extract_strided_slice %5 {offsets = [0, 128], sizes = [64, 128], strides = [1, 1]} : vector<64x256xf32> to vector<64x128xf32>
    %c0_5 = arith.constant 0 : index
    %c0_6 = arith.constant 0 : index
    %8 = vector.load %arg1[%c0_5, %c0_6] : memref<64x128xf32, #tpu.memory_space<vmem>>, vector<64x128xf32>
    %9 = arith.mulf %6, %8 : vector<64x128xf32>
    %10 = arith.addf %9, %7 : vector<64x128xf32>
    %11 = arith.addf %10, %0 : vector<64x128xf32>
    %cst_7 = arith.constant dense<0.000000e+00> : vector<64xf32>
    %12 = vector.multi_reduction <add>, %11, %cst_7 [1] : vector<64x128xf32> to vector<64xf32>
    %13 = vector.shape_cast %12 : vector<64xf32> to vector<64x1xf32>
    %cst_8 = arith.constant 1.280000e+02 : f32
    %14 = vector.broadcast %cst_8 : f32 to vector<64x1xf32>
    %15 = arith.divf %13, %14 : vector<64x1xf32>
    %16 = vector.broadcast %15 : vector<64x1xf32> to vector<64x128xf32>
    %17 = arith.subf %11, %16 : vector<64x128xf32>
    %18 = arith.mulf %17, %17 : vector<64x128xf32>
    %cst_9 = arith.constant dense<0.000000e+00> : vector<64xf32>
    %19 = vector.multi_reduction <add>, %18, %cst_9 [1] : vector<64x128xf32> to vector<64xf32>
    %20 = vector.shape_cast %19 : vector<64xf32> to vector<64x1xf32>
    %cst_10 = arith.constant 1.280000e+02 : f32
    %21 = vector.broadcast %cst_10 : f32 to vector<64x1xf32>
    %22 = arith.divf %20, %21 : vector<64x1xf32>
    %cst_11 = arith.constant 9.99999974E-6 : f32
    %23 = vector.broadcast %cst_11 : f32 to vector<64x1xf32>
    %24 = arith.addf %22, %23 : vector<64x1xf32>
    %25 = math.rsqrt %24 : vector<64x1xf32>
    %26 = vector.broadcast %25 : vector<64x1xf32> to vector<64x128xf32>
    %27 = arith.mulf %17, %26 : vector<64x128xf32>
    %c0_12 = arith.constant 0 : index
    %c0_13 = arith.constant 0 : index
    %28 = vector.load %arg5[%c0_12, %c0_13] : memref<1x128xf32, #tpu.memory_space<vmem>>, vector<1x128xf32>
    %29 = vector.broadcast %28 : vector<1x128xf32> to vector<64x128xf32>
    %30 = arith.mulf %27, %29 : vector<64x128xf32>
    %c0_14 = arith.constant 0 : index
    %c0_15 = arith.constant 0 : index
    %31 = vector.load %arg6[%c0_14, %c0_15] : memref<1x128xf32, #tpu.memory_space<vmem>>, vector<1x128xf32>
    %32 = vector.broadcast %31 : vector<1x128xf32> to vector<64x128xf32>
    %33 = arith.addf %30, %32 : vector<64x128xf32>
    %c0_16 = arith.constant 0 : index
    %c0_17 = arith.constant 0 : index
    %34 = vector.load %arg7[%c0_16, %c0_17] : memref<64x128xf32, #tpu.memory_space<vmem>>, vector<64x128xf32>
    tpu.vector_store %arg7[%c0_16, %c0_17], %33 {strides = array<i32>} : memref<64x128xf32, #tpu.memory_space<vmem>>, vector<64x128xf32>,
    return
  }
  func.func @transform_0(%arg0: i32) -> (i32, i32) {
    %c0_i32 = arith.constant 0 : i32
    %c0_i32_0 = arith.constant 0 : i32
    return %arg0, %c0_i32 : i32, i32
  }
  func.func @transform_1(%arg0: i32) -> (i32, i32) {
    %c0_i32 = arith.constant 0 : i32
    %c0_i32_0 = arith.constant 0 : i32
    return %arg0, %c0_i32 : i32, i32
  }
  func.func @transform_2(%arg0: i32) -> (i32, i32) {
    %c0_i32 = arith.constant 0 : i32
    %c0_i32_0 = arith.constant 0 : i32
    %c0_i32_1 = arith.constant 0 : i32
    return %c0_i32, %c0_i32_0 : i32, i32
  }
  func.func @transform_3(%arg0: i32) -> (i32, i32) {
    %c0_i32 = arith.constant 0 : i32
    %c0_i32_0 = arith.constant 0 : i32
    %c0_i32_1 = arith.constant 0 : i32
    return %c0_i32, %c0_i32_0 : i32, i32
  }
  func.func @transform_4(%arg0: i32) -> (i32, i32) {
    %c0_i32 = arith.constant 0 : i32
    %c0_i32_0 = arith.constant 0 : i32
    %c0_i32_1 = arith.constant 0 : i32
    return %c0_i32, %c0_i32_0 : i32, i32
  }
  func.func @transform_5(%arg0: i32) -> (i32, i32) {
    %c0_i32 = arith.constant 0 : i32
    %c0_i32_0 = arith.constant 0 : i32
    %c0_i32_1 = arith.constant 0 : i32
    return %c0_i32, %c0_i32_0 : i32, i32
  }
  func.func @transform_6(%arg0: i32) -> (i32, i32) {
    %c0_i32 = arith.constant 0 : i32
    %c0_i32_0 = arith.constant 0 : i32
    return %arg0, %c0_i32 : i32, i32
  }
}

</mosaic_0001>

<llo_original>
// kernel: tpu_custom_call.1
$region0: #{tpu_custom_call.1}
  #allocation0 [shape = 'u32[]', space=smem, size = 0x4, offset = 0x4, fixed_abs, tag = 'smem constant byte address 0x4 - core index']
  #allocation1 [shape = 'u32[144,128]{1,0:T(1,128)}', space=vmem, size = 0x12000, scoped, tag = 'internal scratch']
  %s0 = inlined_call_operand.hbm [shape: f32[256,128], index: 0, kind: input, shape index: {}]
  %s1 = inlined_call_operand.hbm [shape: f32[256,128], index: 1, kind: input, shape index: {}]
  %s2 = inlined_call_operand.hbm [shape: f32[128,256], index: 2, kind: input, shape index: {}]
  %s3 = inlined_call_operand.vmem [shape: f32[1,256], index: 3, kind: input, shape index: {}]
  %s4 = inlined_call_operand.vmem [shape: f32[1,128], index: 4, kind: input, shape index: {}]
  %s5 = inlined_call_operand.vmem [shape: f32[1,128], index: 5, kind: input, shape index: {}]
  %s6 = inlined_call_operand.hbm [shape: f32[256,128], index: 6, kind: output, shape index: {}]
  %s7 = sld [smem:[#allocation0]]
  $region69: #{tpu_custom_call.1} parent=0
    _
  %s9 = ssub.s32 1, %s7
  %s10 = scalar_select 0, %s9, %s7
  $region1: #{tpu_custom_call.1} parent=0
    #allocation2 [shape = 'u8[65536]{0}', space=vmem, size = 0x10000, scoped, tag = 'input window, operand 0']
    #allocation3 [shape = 's32[2]{0}', space=sflag, size = 0x8, scoped, tag = 'scoped memory for tpu_custom_call.1']
    #allocation4 [shape = 's32[2]{0}', space=sflag, size = 0x8, scoped, tag = 'scoped memory for tpu_custom_call.1']
    #allocation5 [shape = 'u8[65536]{0}', space=vmem, size = 0x10000, scoped, tag = 'input window, operand 1']
    #allocation6 [shape = 's32[2]{0}', space=sflag, size = 0x8, scoped, tag = 'scoped memory for tpu_custom_call.1']
    #allocation7 [shape = 'u8[131072]{0}', space=vmem, size = 0x20000, scoped, tag = 'input window, operand 2, single buffered']
    #allocation8 [shape = 'u8[65536]{0}', space=vmem, size = 0x10000, scoped, tag = 'output window, operand 0']
    %11 = vsyncpa [#allocation3], 0
    %s12 = scalar_lea.sflag [#allocation3], 1
    %13 = vsyncpa %s12, 0
    %14 = vsyncpa [#allocation6], 0
    %s15 = scalar_lea.sflag [#allocation6], 1
    %16 = vsyncpa %s15, 0
    %17 = vsyncpa [#allocation4], 0
    %s18 = scalar_lea.sflag [#allocation4], 1
    %19 = vsyncpa %s18, 0
    loop: start=0, step=1, limit=6
    $region2: #{tpu_custom_call.1} parent=1 // loop_pre_header
      _
    $region3: #{tpu_custom_call.1} parent=1 // loop_header
      %s21 = sphi 0, %s25
      %p22 = scmp.ge.s32.totalorder %s21, 6
      %s31 = sphi 0, %s33
      %s34 = sphi 0, %s31
      %s35 = sphi 0, %s34
      %s51 = sphi 0, %s35
      %s57 = sphi 0, %s59
      %s60 = sphi 0, %s57
      %s61 = sphi 0, %s60
      %s77 = sphi 0, %s61
      %s81 = sphi 0, %s81
      %s83 = sphi 0, %s81
      %s84 = sphi 0, %s83
      %s98 = sphi 0, %s84
      %s102 = sphi 0, %s102
      %s104 = sphi 0, %s102
      %s105 = sphi 0, %s104
      %s119 = sphi 0, %s105
      %s123 = sphi 0, %s123
      %s125 = sphi 0, %s123
      %s126 = sphi 0, %s125
      %s140 = sphi 0, %s126
      %s144 = sphi 0, %s144
      %s146 = sphi 0, %s144
      %s147 = sphi 0, %s146
      %s161 = sphi 0, %s147
      %s167 = sphi 0, %s169
      %s170 = sphi 0, %s167
      %s171 = sphi 0, %s170
      %s187 = sphi 0, %s171
    $region4: #{tpu_custom_call.1} parent=1 // loop_header_branch
      %24 = sbr.rel (%p22) target = $region8
    $region5: #{tpu_custom_call.1} parent=1 // loop_body
      %s26 = ssub.s32 %s21, 1
      %s27 = ssub.s32 %s21, 2
      %s28 = sadd.s32 %s21, 1
      %s29 = ssub.s32 %s21, %s28
      %p30 = scmp.eq.s32.totalorder %s29, 0
      %s32 = sadd.s32 %s31, 1
      %s33 = scalar_select %p30, %s31, %s32
      %p36 = pneg %p30
      %p37 = scmp.eq.s32.totalorder %s21, 3
      %p38 = por %p36, %p37
      %p39 = scmp.ne.s32.totalorder %s31, %s34
      %p40 = scmp.eq.s32.totalorder %s21, 0
      %p41 = por %p39, %p40
      %p42 = scmp.ne.s32.totalorder %s31, %s34
      %p43 = scmp.eq.s32.totalorder %s26, 3
      %p44 = por %p42, %p43
      %p45 = scmp.ne.s32.totalorder %s34, %s35
      %p46 = scmp.eq.s32.totalorder %s26, 0
      %p47 = por %p45, %p46
      %p48 = scmp.ne.s32.totalorder %s34, %s35
      %p49 = scmp.eq.s32.totalorder %s27, 3
      %p50 = por %p48, %p49
      %p52 = scmp.ne.s32.totalorder %s35, %s51
      %p53 = scmp.eq.s32.totalorder %s27, 0
      %p54 = por %p52, %p53
      %s55 = ssub.s32 %s21, %s28
      %p56 = scmp.eq.s32.totalorder %s55, 0
      %s58 = sadd.s32 %s57, 1
      %s59 = scalar_select %p56, %s57, %s58
      %p62 = pneg %p56
      %p63 = scmp.eq.s32.totalorder %s21, 3
      %p64 = por %p62, %p63
      %p65 = scmp.ne.s32.totalorder %s57, %s60
      %p66 = scmp.eq.s32.totalorder %s21, 0
      %p67 = por %p65, %p66
      %p68 = scmp.ne.s32.totalorder %s57, %s60
      %p69 = scmp.eq.s32.totalorder %s26, 3
      %p70 = por %p68, %p69
      %p71 = scmp.ne.s32.totalorder %s60, %s61
      %p72 = scmp.eq.s32.totalorder %s26, 0
      %p73 = por %p71, %p72
      %p74 = scmp.ne.s32.totalorder %s60, %s61
      %p75 = scmp.eq.s32.totalorder %s27, 3
      %p76 = por %p74, %p75
      %p78 = scmp.ne.s32.totalorder %s61, %s77
      %p79 = scmp.eq.s32.totalorder %s27, 0
      %p80 = por %p78, %p79
      %s82 = sadd.s32 %s81, 1
      %p85 = scmp.eq.s32.totalorder %s21, 3
      %p86 = scmp.ne.s32.totalorder %s81, %s83
      %p87 = scmp.eq.s32.totalorder %s21, 0
      %p88 = por %p86, %p87
      %p89 = scmp.ne.s32.totalorder %s81, %s83
      %p90 = scmp.eq.s32.totalorder %s26, 3
      %p91 = por %p89, %p90
      %p92 = scmp.ne.s32.totalorder %s83, %s84
      %p93 = scmp.eq.s32.totalorder %s26, 0
      %p94 = por %p92, %p93
      %p95 = scmp.ne.s32.totalorder %s83, %s84
      %p96 = scmp.eq.s32.totalorder %s27, 3
      %p97 = por %p95, %p96
      %p99 = scmp.ne.s32.totalorder %s84, %s98
      %p100 = scmp.eq.s32.totalorder %s27, 0
      %p101 = por %p99, %p100
      %s103 = sadd.s32 %s102, 1
      %p106 = scmp.eq.s32.totalorder %s21, 3
      %p107 = scmp.ne.s32.totalorder %s102, %s104
      %p108 = scmp.eq.s32.totalorder %s21, 0
      %p109 = por %p107, %p108
      %p110 = scmp.ne.s32.totalorder %s102, %s104
      %p111 = scmp.eq.s32.totalorder %s26, 3
      %p112 = por %p110, %p111
      %p113 = scmp.ne.s32.totalorder %s104, %s105
      %p114 = scmp.eq.s32.totalorder %s26, 0
      %p115 = por %p113, %p114
      %p116 = scmp.ne.s32.totalorder %s104, %s105
      %p117 = scmp.eq.s32.totalorder %s27, 3
      %p118 = por %p116, %p117
      %p120 = scmp.ne.s32.totalorder %s105, %s119
      %p121 = scmp.eq.s32.totalorder %s27, 0
      %p122 = por %p120, %p121
      %s124 = sadd.s32 %s123, 1
      %p127 = scmp.eq.s32.totalorder %s21, 3
      %p128 = scmp.ne.s32.totalorder %s123, %s125
      %p129 = scmp.eq.s32.totalorder %s21, 0
      %p130 = por %p128, %p129
      %p131 = scmp.ne.s32.totalorder %s123, %s125
      %p132 = scmp.eq.s32.totalorder %s26, 3
      %p133 = por %p131, %p132
      %p134 = scmp.ne.s32.totalorder %s125, %s126
      %p135 = scmp.eq.s32.totalorder %s26, 0
      %p136 = por %p134, %p135
      %p137 = scmp.ne.s32.totalorder %s125, %s126
      %p138 = scmp.eq.s32.totalorder %s27, 3
      %p139 = por %p137, %p138
      %p141 = scmp.ne.s32.totalorder %s126, %s140
      %p142 = scmp.eq.s32.totalorder %s27, 0
      %p143 = por %p141, %p142
      %s145 = sadd.s32 %s144, 1
      %p148 = scmp.eq.s32.totalorder %s21, 3
      %p149 = scmp.ne.s32.totalorder %s144, %s146
      %p150 = scmp.eq.s32.totalorder %s21, 0
      %p151 = por %p149, %p150
      %p152 = scmp.ne.s32.totalorder %s144, %s146
      %p153 = scmp.eq.s32.totalorder %s26, 3
      %p154 = por %p152, %p153
      %p155 = scmp.ne.s32.totalorder %s146, %s147
      %p156 = scmp.eq.s32.totalorder %s26, 0
      %p157 = por %p155, %p156
      %p158 = scmp.ne.s32.totalorder %s146, %s147
      %p159 = scmp.eq.s32.totalorder %s27, 3
      %p160 = por %p158, %p159
      %p162 = scmp.ne.s32.totalorder %s147, %s161
      %p163 = scmp.eq.s32.totalorder %s27, 0
      %p164 = por %p162, %p163
      %s165 = ssub.s32 %s21, %s28
      %p166 = scmp.eq.s32.totalorder %s165, 0
      %s168 = sadd.s32 %s167, 1
      %s169 = scalar_select %p166, %s167, %s168
      %p172 = pneg %p166
      %p173 = scmp.eq.s32.totalorder %s21, 3
      %p174 = por %p172, %p173
      %p175 = scmp.ne.s32.totalorder %s167, %s170
      %p176 = scmp.eq.s32.totalorder %s21, 0
      %p177 = por %p175, %p176
      %p178 = scmp.ne.s32.totalorder %s167, %s170
      %p179 = scmp.eq.s32.totalorder %s26, 3
      %p180 = por %p178, %p179
      %p181 = scmp.ne.s32.totalorder %s170, %s171
      %p182 = scmp.eq.s32.totalorder %s26, 0
      %p183 = por %p181, %p182
      %p184 = scmp.ne.s32.totalorder %s170, %s171
      %p185 = scmp.eq.s32.totalorder %s27, 3
      %p186 = por %p184, %p185
      %p188 = scmp.ne.s32.totalorder %s171, %s187
      %p189 = scmp.eq.s32.totalorder %s27, 0
      %p190 = por %p188, %p189
      %p191 = scmp.le.s32.totalorder 1, %s21
      %p192 = scmp.lt.s32.totalorder %s21, 5
      %p193 = pnand %p191, %p192
      %p194 = pneg %p193
      // Predicated region
      $region9: #{tpu_custom_call.1} parent=5 // pred_check
        _
      $region10: #{tpu_custom_call.1} parent=5 // pred_check_branch
        %196 = sbr.rel (%p193) target = $region12
      $region11: #{tpu_custom_call.1} parent=5 // pred_region
        %s197 = ssub.s32 %s21, 1
        // Predicated region
        $region13: #{tpu_custom_call.1} parent=11 // pred_check
          %p198 = pneg %p94
        $region14: #{tpu_custom_call.1} parent=11 // pred_check_branch
          %200 = sbr.rel (%p198) target = $region16
        $region15: #{tpu_custom_call.1} parent=11 // pred_region
          %s202 = ssub.s32 4096, 4096
          %203 = vsyncadd [#allocation6], %s202
          %s204 = sshll.u32 [#allocation7], 4
          %s205 = int_to_ptr.vmem [resolvable:$true] %s204
          %210 = dma.hbm_to_vmem [thread:$0]  %s2, 4096, %s205, [#allocation6], 256, 256, 16
        $region16: #{tpu_custom_call.1} parent=11 // pred_fallthru
          _
        // Predicated region
        $region17: #{tpu_custom_call.1} parent=11 // pred_check
          %p211 = pneg %p115
        $region18: #{tpu_custom_call.1} parent=11 // pred_check_branch
          %213 = sbr.rel (%p211) target = $region20
        $region19: #{tpu_custom_call.1} parent=11 // pred_region
          _
        $region20: #{tpu_custom_call.1} parent=11 // pred_fallthru
          _
        // Predicated region
        $region21: #{tpu_custom_call.1} parent=11 // pred_check
          %p214 = pneg %p136
        $region22: #{tpu_custom_call.1} parent=11 // pred_check_branch
          %216 = sbr.rel (%p214) target = $region24
        $region23: #{tpu_custom_call.1} parent=11 // pred_region
          _
        $region24: #{tpu_custom_call.1} parent=11 // pred_fallthru
          _
        // Predicated region
        $region25: #{tpu_custom_call.1} parent=11 // pred_check
          %p217 = pneg %p157
        $region26: #{tpu_custom_call.1} parent=11 // pred_check_branch
          %219 = sbr.rel (%p217) target = $region28
        $region27: #{tpu_custom_call.1} parent=11 // pred_region
          _
        $region28: #{tpu_custom_call.1} parent=11 // pred_fallthru
          _
      $region12: #{tpu_custom_call.1} parent=5 // pred_fallthru
        _
      %p220 = scmp.lt.s32.totalorder %s21, 4
      // Predicated region
      $region29: #{tpu_custom_call.1} parent=5 // pred_check
        %p221 = pneg %p220
      $region30: #{tpu_custom_call.1} parent=5 // pred_check_branch
        %223 = sbr.rel (%p221) target = $region32
      $region31: #{tpu_custom_call.1} parent=5 // pred_region
        // Predicated region
        $region33: #{tpu_custom_call.1} parent=31 // pred_check
          %p224 = pneg %p41
        $region34: #{tpu_custom_call.1} parent=31 // pred_check_branch
          %226 = sbr.rel (%p224) target = $region36
        $region35: #{tpu_custom_call.1} parent=31 // pred_region
          %s227 = sand.u32 %s31, 1
          %s228 = scalar_lea.sflag [#allocation3], %s227
          %s229 = sand.u32 %s31, 1
          %s230 = smul.addr %s229, 64
          %s231 = scalar_lea.vmem [#allocation2], %s230
          %s232 = smul.u32 8, %s21
          %s234 = ssub.s32 1024, 1024
          %235 = vsyncadd %s228, %s234
          %s236 = smul.addr %s232, 128
          %s237 = scalar_lea.hbm %s0, %s236
          %s238 = sshll.u32 %s231, 4
          %s239 = int_to_ptr.vmem [resolvable:$true] %s238
          %244 = dma.hbm_to_vmem [thread:$0]  %s237, 1024, %s239, %s228, 128, 128, 8
        $region36: #{tpu_custom_call.1} parent=31 // pred_fallthru
          _
        // Predicated region
        $region37: #{tpu_custom_call.1} parent=31 // pred_check
          %p245 = pneg %p67
        $region38: #{tpu_custom_call.1} parent=31 // pred_check_branch
          %247 = sbr.rel (%p245) target = $region40
        $region39: #{tpu_custom_call.1} parent=31 // pred_region
          %s248 = sand.u32 %s21, 1
          %s249 = scalar_lea.sflag [#allocation6], %s248
          %s250 = sand.u32 %s57, 1
          %s251 = smul.addr %s250, 64
          %s252 = scalar_lea.vmem [#allocation5], %s251
          %s253 = smul.u32 8, %s21
          %s255 = ssub.s32 1024, 1024
          %256 = vsyncadd %s249, %s255
          %s257 = smul.addr %s253, 128
          %s258 = scalar_lea.hbm %s1, %s257
          %s259 = sshll.u32 %s252, 4
          %s260 = int_to_ptr.vmem [resolvable:$true] %s259
          %265 = dma.hbm_to_vmem [thread:$0]  %s258, 1024, %s260, %s249, 128, 128, 8
        $region40: #{tpu_custom_call.1} parent=31 // pred_fallthru
          _
      $region32: #{tpu_custom_call.1} parent=5 // pred_fallthru
        _
      %p266 = scmp.le.s32.totalorder 1, %s21
      %p267 = scmp.lt.s32.totalorder %s21, 5
      %p268 = pnand %p266, %p267
      %p269 = pneg %p268
      // Predicated region
      $region41: #{tpu_custom_call.1} parent=5 // pred_check
        _
      $region42: #{tpu_custom_call.1} parent=5 // pred_check_branch
        %271 = sbr.rel (%p268) target = $region44
      $region43: #{tpu_custom_call.1} parent=5 // pred_region
        %s272 = ssub.s32 %s21, 1
        %s273 = sand.u32 %s34, 1
        %s274 = scalar_lea.sflag [#allocation3], %s273
        %s275 = sand.u32 %s34, 1
        %s276 = smul.addr %s275, 64
        %s277 = scalar_lea.vmem [#allocation2], %s276
        // Predicated region
        $region45: #{tpu_custom_call.1} parent=43 // pred_check
          %p278 = pneg %p47
        $region46: #{tpu_custom_call.1} parent=43 // pred_check_branch
          %280 = sbr.rel (%p278) target = $region48
        $region47: #{tpu_custom_call.1} parent=43 // pred_region
          %281 = dma.done %s274, 1024
        $region48: #{tpu_custom_call.1} parent=43 // pred_fallthru
          _
        %s282 = sand.u32 %s26, 1
        %s283 = scalar_lea.sflag [#allocation6], %s282
        %s284 = sand.u32 %s60, 1
        %s285 = smul.addr %s284, 64
        %s286 = scalar_lea.vmem [#allocation5], %s285
        // Predicated region
        $region49: #{tpu_custom_call.1} parent=43 // pred_check
          %p287 = pneg %p73
        $region50: #{tpu_custom_call.1} parent=43 // pred_check_branch
          %289 = sbr.rel (%p287) target = $region52
        $region51: #{tpu_custom_call.1} parent=43 // pred_region
          %290 = dma.done %s283, 1024
        $region52: #{tpu_custom_call.1} parent=43 // pred_fallthru
          _
        // Predicated region
        $region53: #{tpu_custom_call.1} parent=43 // pred_check
          %p291 = pneg %p94
        $region54: #{tpu_custom_call.1} parent=43 // pred_check_branch
          %293 = sbr.rel (%p291) target = $region56
        $region55: #{tpu_custom_call.1} parent=43 // pred_region
          %294 = dma.done [#allocation6], 4096
        $region56: #{tpu_custom_call.1} parent=43 // pred_fallthru
          _
        %s295 = sand.u32 %s34, 1
        %s296 = scalar_lea.sflag [#allocation3], %s295
        %s297 = sand.u32 %s34, 1
        %s298 = smul.addr %s297, 64
        %s299 = scalar_lea.vmem [#allocation2], %s298
        %p300 = pneg %p47
        %p301 = pneg %p44
        %s302 = sand.u32 %s26, 1
        %s303 = scalar_lea.sflag [#allocation6], %s302
        %s304 = sand.u32 %s60, 1
        %s305 = smul.addr %s304, 64
        %s306 = scalar_lea.vmem [#allocation5], %s305
        %p307 = pneg %p73
        %p308 = pneg %p70
        %p309 = pneg %p94
        %p310 = pneg %p91
        %p311 = pneg %p115
        %p312 = pneg %p112
        %p313 = pneg %p136
        %p314 = pneg %p133
        %p315 = pneg %p157
        %p316 = pneg %p154
        %p317 = pneg %p183
        %p318 = pneg %p180
        %s319 = sand.u32 %s170, 1
        %s320 = scalar_lea.sflag [#allocation4], %s319
        %s321 = sand.u32 %s170, 1
        %s322 = smul.addr %s321, 64
        %s323 = scalar_lea.vmem [#allocation8], %s322
        %s324 = smul.u32 8, %s26
        %s325 = smul.u32 8, %s26
        %s326 = smul.u32 8, %s26
        %v327 = vld [vmem:[%s286] sm:$0xff]
        %v328 = vld [vmem:[%s286 + $0x8] sm:$0xff]
        %v329 = vld [vmem:[%s286 + $0x10] sm:$0xff]
        %v330 = vld [vmem:[%s286 + $0x18] sm:$0xff]
        %v331 = vld [vmem:[%s286 + $0x20] sm:$0xff]
        %v332 = vld [vmem:[%s286 + $0x28] sm:$0xff]
        %v333 = vld [vmem:[%s286 + $0x30] sm:$0xff]
        %v334 = vld [vmem:[%s286 + $0x38] sm:$0xff]
        %v335 = vld [vmem:[#allocation7] sm:$0xff]
        %v336 = vld [vmem:[#allocation7 + $0x8] sm:$0xff]
        %v337 = vld [vmem:[#allocation7 + $0x10] sm:$0xff]
        %v338 = vld [vmem:[#allocation7 + $0x18] sm:$0xff]
        %v339 = vld [vmem:[#allocation7 + $0x20] sm:$0xff]
        %v340 = vld [vmem:[#allocation7 + $0x28] sm:$0xff]
        %v341 = vld [vmem:[#allocation7 + $0x30] sm:$0xff]
        %v342 = vld [vmem:[#allocation7 + $0x38] sm:$0xff]
        %v343 = vld [vmem:[#allocation7 + $0x40] sm:$0xff]
        %v344 = vld [vmem:[#allocation7 + $0x48] sm:$0xff]
        %v345 = vld [vmem:[#allocation7 + $0x50] sm:$0xff]
        %v346 = vld [vmem:[#allocation7 + $0x58] sm:$0xff]
        %v347 = vld [vmem:[#allocation7 + $0x60] sm:$0xff]
        %v348 = vld [vmem:[#allocation7 + $0x68] sm:$0xff]
        %v349 = vld [vmem:[#allocation7 + $0x70] sm:$0xff]
        %v350 = vld [vmem:[#allocation7 + $0x78] sm:$0xff]
        %v351 = vld [vmem:[#allocation7 + $0x80] sm:$0xff]
        %v352 = vld [vmem:[#allocation7 + $0x88] sm:$0xff]
        %v353 = vld [vmem:[#allocation7 + $0x90] sm:$0xff]
        %v354 = vld [vmem:[#allocation7 + $0x98] sm:$0xff]
        %v355 = vld [vmem:[#allocation7 + $0xa0] sm:$0xff]
        %v356 = vld [vmem:[#allocation7 + $0xa8] sm:$0xff]
        %v357 = vld [vmem:[#allocation7 + $0xb0] sm:$0xff]
        %v358 = vld [vmem:[#allocation7 + $0xb8] sm:$0xff]
        %v359 = vld [vmem:[#allocation7 + $0xc0] sm:$0xff]
        %v360 = vld [vmem:[#allocation7 + $0xc8] sm:$0xff]
        %v361 = vld [vmem:[#allocation7 + $0xd0] sm:$0xff]
        %v362 = vld [vmem:[#allocation7 + $0xd8] sm:$0xff]
        %v363 = vld [vmem:[#allocation7 + $0xe0] sm:$0xff]
        %v364 = vld [vmem:[#allocation7 + $0xe8] sm:$0xff]
        %v365 = vld [vmem:[#allocation7 + $0xf0] sm:$0xff]
        %v366 = vld [vmem:[#allocation7 + $0xf8] sm:$0xff]
        %v367 = vld [vmem:[%s3] sm:$0x3]
        %v369 = vlaneseq
        %v370 = vshrl.u32 %v369, 7
        %v371 = vsub.s32 0, %v370
        %v372 = vrot.slane %v367, %v371
        %v373 = vlaneseq
        %v374 = vshrl.u32 %v373, 7
        %v375 = vsub.s32 1, %v374
        %v376 = vrot.slane %v367, %v375
        %379 = vmatprep.subr.mxu0 %v336
        %380 = vmatpush1.msra.mxu0 %v335
        %381 = vmatprep.subr.mxu0 %v338
        %382 = vmatpush1.msra.mxu0 %v337
        %383 = vmatprep.subr.mxu0 %v340
        %384 = vmatpush1.msra.mxu0 %v339
        %385 = vmatprep.subr.mxu0 %v342
        %386 = vmatpush1.msra.mxu0 %v341
        %387 = vmatprep.subr.mxu0 %v344
        %388 = vmatpush1.msra.mxu0 %v343
        %389 = vmatprep.subr.mxu0 %v346
        %390 = vmatpush1.msra.mxu0 %v345
        %391 = vmatprep.subr.mxu0 %v348
        %392 = vmatpush1.msra.mxu0 %v347
        %393 = vmatprep.subr.mxu0 %v350
        %394 = vmatpush1.msra.mxu0 %v349
        %395 = vmatprep.subr.mxu0 %v352
        %396 = vmatpush1.msra.mxu0 %v351
        %397 = vmatprep.subr.mxu0 %v354
        %398 = vmatpush1.msra.mxu0 %v353
        %399 = vmatprep.subr.mxu0 %v356
        %400 = vmatpush1.msra.mxu0 %v355
        %401 = vmatprep.subr.mxu0 %v358
        %402 = vmatpush1.msra.mxu0 %v357
        %403 = vmatprep.subr.mxu0 %v360
        %404 = vmatpush1.msra.mxu0 %v359
        %405 = vmatprep.subr.mxu0 %v362
        %406 = vmatpush1.msra.mxu0 %v361
        %407 = vmatprep.subr.mxu0 %v364
        %408 = vmatpush1.msra.mxu0 %v363
        %409 = vmatprep.subr.mxu0 %v366
        %410 = vmatpush1.msra.mxu0 %v365
        %411 = vmatprep.subr.mxu0 0.0
        %412 = vmatpush1.msra.mxu0 0.0
        %413 = vmatprep.subr.mxu0 0.0
        %414 = vmatpush1.msra.mxu0 0.0
        %415 = vmatprep.subr.mxu0 0.0
        %416 = vmatpush1.msra.mxu0 0.0
        %417 = vmatprep.subr.mxu0 0.0
        %418 = vmatpush1.msra.mxu0 0.0
        %419 = vmatprep.subr.mxu0 0.0
        %420 = vmatpush1.msra.mxu0 0.0
        %421 = vmatprep.subr.mxu0 0.0
        %422 = vmatpush1.msra.mxu0 0.0
        %423 = vmatprep.subr.mxu0 0.0
        %424 = vmatpush1.msra.mxu0 0.0
        %425 = vmatprep.subr.mxu0 0.0
        %426 = vmatpush1.msra.mxu0 0.0
        %427 = vmatprep.subr.mxu0 0.0
        %428 = vmatpush1.msra.mxu0 0.0
        %429 = vmatprep.subr.mxu0 0.0
        %430 = vmatpush1.msra.mxu0 0.0
        %431 = vmatprep.subr.mxu0 0.0
        %432 = vmatpush1.msra.mxu0 0.0
        %433 = vmatprep.subr.mxu0 0.0
        %434 = vmatpush1.msra.mxu0 0.0
        %435 = vmatprep.subr.mxu0 0.0
        %436 = vmatpush1.msra.mxu0 0.0
        %437 = vmatprep.subr.mxu0 0.0
        %438 = vmatpush1.msra.mxu0 0.0
        %439 = vmatprep.subr.mxu0 0.0
        %440 = vmatpush1.msra.mxu0 0.0
        %441 = vmatprep.subr.mxu0 0.0
        %442 = vmatpush1.msra.mxu0 0.0
        %443 = vmatprep.mubr.f32.mxu0 0.0
        %444 = vmatmul.mubr.f32.gmra.mrb[0].mxu0 %v327
        %v445 = vpop.f32.mrb[0].mxu0
        %v446 = vadd.f32 %v372, %v445
        %v447 = vpop.f32.mrb[0].mxu0
        %v448 = vadd.f32 %v376, %v447
        %449 = vmatprep.mubr.f32.mxu0 0.0
        %450 = vmatmul.mubr.f32.gmra.mrb[0].mxu0 %v328
        %v451 = vpop.f32.mrb[0].mxu0
        %v452 = vadd.f32 %v372, %v451
        %v453 = vpop.f32.mrb[0].mxu0
        %v454 = vadd.f32 %v376, %v453
        %455 = vmatprep.mubr.f32.mxu0 0.0
        %456 = vmatmul.mubr.f32.gmra.mrb[0].mxu0 %v329
        %v457 = vpop.f32.mrb[0].mxu0
        %v458 = vadd.f32 %v372, %v457
        %v459 = vpop.f32.mrb[0].mxu0
        %v460 = vadd.f32 %v376, %v459
        %461 = vmatprep.mubr.f32.mxu0 0.0
        %462 = vmatmul.mubr.f32.gmra.mrb[0].mxu0 %v330
        %v463 = vpop.f32.mrb[0].mxu0
        %v464 = vadd.f32 %v372, %v463
        %v465 = vpop.f32.mrb[0].mxu0
        %v466 = vadd.f32 %v376, %v465
        %467 = vmatprep.mubr.f32.mxu0 0.0
        %468 = vmatmul.mubr.f32.gmra.mrb[0].mxu0 %v331
        %v469 = vpop.f32.mrb[0].mxu0
        %v470 = vadd.f32 %v372, %v469
        %v471 = vpop.f32.mrb[0].mxu0
        %v472 = vadd.f32 %v376, %v471
        %473 = vmatprep.mubr.f32.mxu0 0.0
        %474 = vmatmul.mubr.f32.gmra.mrb[0].mxu0 %v332
        %v475 = vpop.f32.mrb[0].mxu0
        %v476 = vadd.f32 %v372, %v475
        %v477 = vpop.f32.mrb[0].mxu0
        %v478 = vadd.f32 %v376, %v477
        %479 = vmatprep.mubr.f32.mxu0 0.0
        %480 = vmatmul.mubr.f32.gmra.mrb[0].mxu0 %v333
        %v481 = vpop.f32.mrb[0].mxu0
        %v482 = vadd.f32 %v372, %v481
        %v483 = vpop.f32.mrb[0].mxu0
        %v484 = vadd.f32 %v376, %v483
        %485 = vmatprep.mubr.f32.mxu0 0.0
        %486 = vmatmul.mubr.f32.gmra.mrb[0].mxu0 %v334
        %v487 = vpop.f32.mrb[0].mxu0
        %v488 = vadd.f32 %v372, %v487
        %v489 = vpop.f32.mrb[0].mxu0
        %v490 = vadd.f32 %v376, %v489
        %491 = vdwg.mxu0
        %v492 = vld [vmem:[%s277] sm:$0xff]
        %v493 = vld [vmem:[%s277 + $0x8] sm:$0xff]
        %v494 = vld [vmem:[%s277 + $0x10] sm:$0xff]
        %v495 = vld [vmem:[%s277 + $0x18] sm:$0xff]
        %v496 = vld [vmem:[%s277 + $0x20] sm:$0xff]
        %v497 = vld [vmem:[%s277 + $0x28] sm:$0xff]
        %v498 = vld [vmem:[%s277 + $0x30] sm:$0xff]
        %v499 = vld [vmem:[%s277 + $0x38] sm:$0xff]
        %v500 = vmul.f32 %v446, %v492
        %v501 = vmul.f32 %v452, %v493
        %v502 = vmul.f32 %v458, %v494
        %v503 = vmul.f32 %v464, %v495
        %v504 = vmul.f32 %v470, %v496
        %v505 = vmul.f32 %v476, %v497
        %v506 = vmul.f32 %v482, %v498
        %v507 = vmul.f32 %v488, %v499
        %v508 = vadd.f32 %v500, %v448
        %v509 = vadd.f32 %v501, %v454
        %v510 = vadd.f32 %v502, %v460
        %v511 = vadd.f32 %v503, %v466
        %v512 = vadd.f32 %v504, %v472
        %v513 = vadd.f32 %v505, %v478
        %v514 = vadd.f32 %v506, %v484
        %v515 = vadd.f32 %v507, %v490
        %v516 = vadd.f32 %v508, %v327
        %v517 = vadd.f32 %v509, %v328
        %v518 = vadd.f32 %v510, %v329
        %v519 = vadd.f32 %v511, %v330
        %v520 = vadd.f32 %v512, %v331
        %v521 = vadd.f32 %v513, %v332
        %v522 = vadd.f32 %v514, %v333
        %v523 = vadd.f32 %v515, %v334
        %524 = vadd.xlane.f32.xlu0 %v516
        %v525 = vpop.xlane.xlu0 %524
        %526 = vadd.xlane.f32.xlu0 %v517
        %v527 = vpop.xlane.xlu0 %526
        %528 = vadd.xlane.f32.xlu0 %v518
        %v529 = vpop.xlane.xlu0 %528
        %530 = vadd.xlane.f32.xlu0 %v519
        %v531 = vpop.xlane.xlu0 %530
        %532 = vadd.xlane.f32.xlu0 %v520
        %v533 = vpop.xlane.xlu0 %532
        %534 = vadd.xlane.f32.xlu0 %v521
        %v535 = vpop.xlane.xlu0 %534
        %536 = vadd.xlane.f32.xlu0 %v522
        %v537 = vpop.xlane.xlu0 %536
        %538 = vadd.xlane.f32.xlu0 %v523
        %v539 = vpop.xlane.xlu0 %538
        %v540 = vrcp.pop 128.0
        %v541 = vmul.f32 %v525, %v540
        %v542 = vmul.f32 %v527, %v540
        %v543 = vmul.f32 %v529, %v540
        %v544 = vmul.f32 %v531, %v540
        %v545 = vmul.f32 %v533, %v540
        %v546 = vmul.f32 %v535, %v540
        %v547 = vmul.f32 %v537, %v540
        %v548 = vmul.f32 %v539, %v540
        %v549 = vsub.f32 %v516, %v541
        %v550 = vsub.f32 %v517, %v542
        %v551 = vsub.f32 %v518, %v543
        %v552 = vsub.f32 %v519, %v544
        %v553 = vsub.f32 %v520, %v545
        %v554 = vsub.f32 %v521, %v546
        %v555 = vsub.f32 %v522, %v547
        %v556 = vsub.f32 %v523, %v548
        %v557 = vmul.f32 %v549, %v549
        %v558 = vmul.f32 %v550, %v550
        %v559 = vmul.f32 %v551, %v551
        %v560 = vmul.f32 %v552, %v552
        %v561 = vmul.f32 %v553, %v553
        %v562 = vmul.f32 %v554, %v554
        %v563 = vmul.f32 %v555, %v555
        %v564 = vmul.f32 %v556, %v556
        %565 = vadd.xlane.f32.xlu0 %v557
        %v566 = vpop.xlane.xlu0 %565
        %567 = vadd.xlane.f32.xlu0 %v558
        %v568 = vpop.xlane.xlu0 %567
        %569 = vadd.xlane.f32.xlu0 %v559
        %v570 = vpop.xlane.xlu0 %569
        %571 = vadd.xlane.f32.xlu0 %v560
        %v572 = vpop.xlane.xlu0 %571
        %573 = vadd.xlane.f32.xlu0 %v561
        %v574 = vpop.xlane.xlu0 %573
        %575 = vadd.xlane.f32.xlu0 %v562
        %v576 = vpop.xlane.xlu0 %575
        %577 = vadd.xlane.f32.xlu0 %v563
        %v578 = vpop.xlane.xlu0 %577
        %579 = vadd.xlane.f32.xlu0 %v564
        %v580 = vpop.xlane.xlu0 %579
        %v581 = vmul.f32 %v566, %v540
        %v582 = vmul.f32 %v568, %v540
        %v583 = vmul.f32 %v570, %v540
        %v584 = vmul.f32 %v572, %v540
        %v585 = vmul.f32 %v574, %v540
        %v586 = vmul.f32 %v576, %v540
        %v587 = vmul.f32 %v578, %v540
        %v588 = vmul.f32 %v580, %v540
        %v589 = vadd.f32 %v581, 1e-05
        %v590 = vadd.f32 %v582, 1e-05
        %v591 = vadd.f32 %v583, 1e-05
        %v592 = vadd.f32 %v584, 1e-05
        %v593 = vadd.f32 %v585, 1e-05
        %v594 = vadd.f32 %v586, 1e-05
        %v595 = vadd.f32 %v587, 1e-05
        %v596 = vadd.f32 %v588, 1e-05
        %v597 = vrsqrt.pop %v589
        %v598 = vrsqrt.pop %v590
        %v599 = vrsqrt.pop %v591
        %v600 = vrsqrt.pop %v592
        %v601 = vrsqrt.pop %v593
        %v602 = vrsqrt.pop %v594
        %v603 = vrsqrt.pop %v595
        %v604 = vrsqrt.pop %v596
        %v605 = vmul.f32 %v549, %v597
        %v606 = vmul.f32 %v550, %v598
        %v607 = vmul.f32 %v551, %v599
        %v608 = vmul.f32 %v552, %v600
        %v609 = vmul.f32 %v553, %v601
        %v610 = vmul.f32 %v554, %v602
        %v611 = vmul.f32 %v555, %v603
        %v612 = vmul.f32 %v556, %v604
        %v613 = vld [vmem:[%s4] sm:$0x1]
        %v615 = vlaneseq
        %v616 = vshrl.u32 %v615, 7
        %v617 = vsub.s32 0, %v616
        %v618 = vrot.slane %v613, %v617
        %v620 = vmul.f32 %v605, %v618
        %v621 = vmul.f32 %v606, %v618
        %v622 = vmul.f32 %v607, %v618
        %v623 = vmul.f32 %v608, %v618
        %v624 = vmul.f32 %v609, %v618
        %v625 = vmul.f32 %v610, %v618
        %v626 = vmul.f32 %v611, %v618
        %v627 = vmul.f32 %v612, %v618
        %v628 = vld [vmem:[%s5] sm:$0x1]
        %v630 = vlaneseq
        %v631 = vshrl.u32 %v630, 7
        %v632 = vsub.s32 0, %v631
        %v633 = vrot.slane %v628, %v632
        %v635 = vadd.f32 %v620, %v633
        %v636 = vadd.f32 %v621, %v633
        %v637 = vadd.f32 %v622, %v633
        %v638 = vadd.f32 %v623, %v633
        %v639 = vadd.f32 %v624, %v633
        %v640 = vadd.f32 %v625, %v633
        %v641 = vadd.f32 %v626, %v633
        %v642 = vadd.f32 %v627, %v633
        %643 = vst [vmem:[%s323] sm:$0xff] %v635
        %644 = vst [vmem:[%s323 + $0x8] sm:$0xff] %v636
        %645 = vst [vmem:[%s323 + $0x10] sm:$0xff] %v637
        %646 = vst [vmem:[%s323 + $0x18] sm:$0xff] %v638
        %647 = vst [vmem:[%s323 + $0x20] sm:$0xff] %v639
        %648 = vst [vmem:[%s323 + $0x28] sm:$0xff] %v640
        %649 = vst [vmem:[%s323 + $0x30] sm:$0xff] %v641
        %650 = vst [vmem:[%s323 + $0x38] sm:$0xff] %v642
        %s651 = sand.u32 %s170, 1
        %s652 = scalar_lea.sflag [#allocation4], %s651
        %s653 = sand.u32 %s170, 1
        %s654 = smul.addr %s653, 64
        %s655 = scalar_lea.vmem [#allocation8], %s654
        // Predicated region
        $region57: #{tpu_custom_call.1} parent=43 // pred_check
          %p656 = pneg %p180
        $region58: #{tpu_custom_call.1} parent=43 // pred_check_branch
          %658 = sbr.rel (%p656) target = $region60
        $region59: #{tpu_custom_call.1} parent=43 // pred_region
          %s659 = smul.u32 8, %s26
          %s661 = ssub.s32 1024, 1024
          %662 = vsyncadd %s652, %s661
          %s663 = smul.addr %s659, 128
          %s664 = scalar_lea.hbm %s6, %s663
          %s665 = sshll.u32 %s655, 4
          %s666 = int_to_ptr.vmem [resolvable:$true] %s665
          %671 = dma.vmem_to_hbm [thread:$0]  %s666, 1024, %s664, %s652, 128, 128, 8
        $region60: #{tpu_custom_call.1} parent=43 // pred_fallthru
          _
      $region44: #{tpu_custom_call.1} parent=5 // pred_fallthru
        _
      %p672 = scmp.le.s32.totalorder 2, %s21
      // Predicated region
      $region61: #{tpu_custom_call.1} parent=5 // pred_check
        %p673 = pneg %p672
      $region62: #{tpu_custom_call.1} parent=5 // pred_check_branch
        %675 = sbr.rel (%p673) target = $region64
      $region63: #{tpu_custom_call.1} parent=5 // pred_region
        %s676 = ssub.s32 %s21, 2
        // Predicated region
        $region65: #{tpu_custom_call.1} parent=63 // pred_check
          %p677 = pneg %p186
        $region66: #{tpu_custom_call.1} parent=63 // pred_check_branch
          %679 = sbr.rel (%p677) target = $region68
        $region67: #{tpu_custom_call.1} parent=63 // pred_region
          %s680 = sand.u32 %s171, 1
          %s681 = scalar_lea.sflag [#allocation4], %s680
          %s682 = sand.u32 %s171, 1
          %s683 = smul.addr %s682, 64
          %s684 = scalar_lea.vmem [#allocation8], %s683
          %685 = dma.done %s681, 1024
        $region68: #{tpu_custom_call.1} parent=63 // pred_fallthru
          _
      $region64: #{tpu_custom_call.1} parent=5 // pred_fallthru
        _
    $region6: #{tpu_custom_call.1} parent=1 // loop_footer
      %s25 = sadd.s32 1, %s21
    $region7: #{tpu_custom_call.1} parent=1 // loop_footer_branch
      %20 = sbr.rel target = $region3
    $region8: #{tpu_custom_call.1} parent=1 // loop_exit
      _
    %686 = vsyncpa [#allocation3], 1
    %s687 = scalar_lea.sflag [#allocation3], 1
    %688 = vsyncpa %s687, 1
    %689 = vsyncpa [#allocation6], 1
    %s690 = scalar_lea.sflag [#allocation6], 1
    %691 = vsyncpa %s690, 1
    %692 = vsyncpa [#allocation4], 1
    %s693 = scalar_lea.sflag [#allocation4], 1
    %694 = vsyncpa %s693, 1

</llo_original>
